<compile_context>
chip_gen: v7x
topology: tpu7x:2x2x1
jax: 0.10.0
libtpu: 0.0.40
codegen_flags: <defaults>
</compile_context>

<pallas_src>
import functools

import jax
import jax.numpy as jnp
from jax.experimental import pallas as pl
from jax.experimental.pallas import tpu as pltpu

HIDDEN = 64


def _value_kernel(x_ref, w1_ref, b1_ref, w2_ref, b2_ref, w3_ref, b3_ref, o_ref):
    """One batch tile of the Value MLP, batch-on-lanes layout.

    x_ref : (D, TB)  bf16   features on sublanes, batch on lanes
    w1_ref: (H, D)   bf16   PyTorch-native (out, in) layout
    b1_ref: (H, 1)   f32
    w2_ref: (H, H)   bf16
    b2_ref: (H, 1)   f32
    w3_ref: (H, 1)   f32    value-head weight as a column
    b3_ref: (1, 1)   f32
    o_ref : (1, TB)  f32    lane-dense output tile
    """
    # Layer 1: (H, D) @ (D, TB) on the MXU, f32 accumulation; bias+tanh in f32.
    h1 = jnp.dot(w1_ref[...], x_ref[...], preferred_element_type=jnp.float32)
    h1 = jnp.tanh(h1 + b1_ref[...])                                  # (H, TB)

    # Layer 2: cast activations to bf16 only right at the MXU input.
    h2 = jnp.dot(w2_ref[...], h1.astype(jnp.bfloat16),
                 preferred_element_type=jnp.float32)
    h2 = jnp.tanh(h2 + b2_ref[...])                                  # (H, TB)

    # Value head: 1-wide matmul replaced by VPU multiply + sublane reduce.
    v = jnp.sum(h2 * w3_ref[...], axis=0, keepdims=True) + b3_ref[...]  # (1, TB)
    o_ref[...] = v.astype(o_ref.dtype)


def _round_up(n, m):
    return ((n + m - 1) // m) * m


@functools.partial(jax.jit, static_argnames=("tile_b",))
def value_forward(x, params, *, tile_b=1024):
    """x: (B, num_inputs) float32. Returns state values of shape (B, 1) float32."""
    w1, b1, w2, b2, w3, b3 = params
    B, D = x.shape
    H = w1.shape[0]

    # Lane-aligned batch tile; clamp for small batches so we don't over-pad.
    tb = min(tile_b, _round_up(max(B, 1), 128))
    b_pad = _round_up(B, tb)
    grid = (b_pad // tb,)

    # Batch-on-lanes layout; bf16 MXU operands (accumulation stays f32 in-kernel).
    x_t = jnp.pad(x.astype(jnp.bfloat16).T, ((0, 0), (0, b_pad - B)))   # (D, b_pad)

    out = pl.pallas_call(
        _value_kernel,
        out_shape=jax.ShapeDtypeStruct((1, b_pad), jnp.float32),
        grid=grid,
        in_specs=[
            pl.BlockSpec((D, tb), lambda i: (0, i)),   # x tile: streamed / pipelined
            pl.BlockSpec((H, D), lambda i: (0, 0)),    # weights & biases: constant
            pl.BlockSpec((H, 1), lambda i: (0, 0)),    # index_map -> resident, one DMA
            pl.BlockSpec((H, H), lambda i: (0, 0)),
            pl.BlockSpec((H, 1), lambda i: (0, 0)),
            pl.BlockSpec((H, 1), lambda i: (0, 0)),
            pl.BlockSpec((1, 1), lambda i: (0, 0)),
        ],
        out_specs=pl.BlockSpec((1, tb), lambda i: (0, i)),   # lane-dense output tile
        compiler_params=pltpu.CompilerParams(
            dimension_semantics=("parallel",),
        ),
    )(x_t, w1.astype(jnp.bfloat16), b1, w2.astype(jnp.bfloat16), b2, w3, b3)

    return out[0, :B].reshape(B, 1)


def init_value_params(key, num_inputs, hidden=HIDDEN):
    """Mirror nn.Linear's U(-1/sqrt(fan_in), 1/sqrt(fan_in)) init, with
    value_head.weight * 0.1 and value_head.bias * 0.0 as in the module.

    Layout: w1 (H, D), w2 (H, H) PyTorch-native (out, in); biases as (out, 1)
    columns; value-head weight stored as a (H, 1) column."""
    k1, k2, k3, k4, k5, k6 = jax.random.split(key, 6)

    def lin(kw, kb, fan_in, fan_out):
        bound = 1.0 / jnp.sqrt(jnp.float32(fan_in))
        w = jax.random.uniform(kw, (fan_out, fan_in), jnp.float32, -bound, bound)
        b = jax.random.uniform(kb, (fan_out, 1), jnp.float32, -bound, bound)
        return w, b

    w1, b1 = lin(k1, k2, num_inputs, hidden)
    w2, b2 = lin(k3, k4, hidden, hidden)
    w3, b3 = lin(k5, k6, hidden, 1)
    w3 = w3.T * 0.1          # value_head.weight.data.mul_(0.1), stored as (H, 1)
    b3 = b3 * 0.0            # value_head.bias.data.mul_(0.0)
    return (w1, b1, w2, b2, w3, b3)


def value_reference(x, params):
    """Pure-JAX f32 reference of the forward pass."""
    w1, b1, w2, b2, w3, b3 = params
    h = jnp.tanh(x @ w1.T + b1.T)
    h = jnp.tanh(h @ w2.T + b2.T)
    return h @ w3 + b3


if __name__ == "__main__":
    num_inputs = 32
    key = jax.random.PRNGKey(0)
    kx1, kx2, kp = jax.random.split(key, 3)
    params = init_value_params(kp, num_inputs)

    # Small single-tile case (batch=8, padded to one 128-wide lane tile).
    x_small = jax.random.normal(kx1, (8, num_inputs), dtype=jnp.float32)
    out_small = jax.block_until_ready(value_forward(x_small, params, tile_b=128))
    ref_small = value_reference(x_small, params)
    assert out_small.shape == (8, 1), out_small.shape
    # bf16 MXU operands (f32 accumulation) => loosen tolerance vs f32 reference.
    assert jnp.allclose(out_small, ref_small, atol=2e-2, rtol=2e-2), "mismatch (small)"

    # Multi-tile ragged case: exercises grid > 1, zero-padding and parallel axis.
    x_big = jax.random.normal(kx2, (300, num_inputs), dtype=jnp.float32)
    out_big = jax.block_until_ready(value_forward(x_big, params, tile_b=128))
    ref_big = value_reference(x_big, params)
    assert out_big.shape == (300, 1), out_big.shape
    assert jnp.allclose(out_big, ref_big, atol=2e-2, rtol=2e-2), "mismatch (big)"

    print("KERNEL_OK")
</pallas_src>

<mosaic_0001>
module attributes {stable_mosaic.version = 11 : i64} {
  func.func @_value_kernel(%arg0: i32, %arg1: memref<32x128xbf16, #tpu.memory_space<vmem>>, %arg2: memref<64x32xbf16, #tpu.memory_space<vmem>>, %arg3: memref<64x1xf32, #tpu.memory_space<vmem>>, %arg4: memref<64x64xbf16, #tpu.memory_space<vmem>>, %arg5: memref<64x1xf32, #tpu.memory_space<vmem>>, %arg6: memref<64x1xf32, #tpu.memory_space<vmem>>, %arg7: memref<1x1xf32, #tpu.memory_space<vmem>>, %arg8: memref<1x128xf32, #tpu.memory_space<vmem>>) attributes {dimension_semantics = [#tpu.dimension_semantics<parallel>], iteration_bounds = array<i64: 1>, scalar_prefetch = 0 : i64, scratch_operands = 0 : i64, tpu.core_type = #tpu.core_type<tc>, window_params = [{transform_indices = @transform_0, window_bounds = array<i64: 32, 128>}, {pipeline_mode = #tpu.pipeline_mode<synchronous>, transform_indices = @transform_1, window_bounds = array<i64: 64, 32>}, {pipeline_mode = #tpu.pipeline_mode<synchronous>, transform_indices = @transform_2, window_bounds = array<i64: 64, 1>}, {pipeline_mode = #tpu.pipeline_mode<synchronous>, transform_indices = @transform_3, window_bounds = array<i64: 64, 64>}, {pipeline_mode = #tpu.pipeline_mode<synchronous>, transform_indices = @transform_4, window_bounds = array<i64: 64, 1>}, {pipeline_mode = #tpu.pipeline_mode<synchronous>, transform_indices = @transform_5, window_bounds = array<i64: 64, 1>}, {pipeline_mode = #tpu.pipeline_mode<synchronous>, transform_indices = @transform_6, window_bounds = array<i64: 1, 1>}, {transform_indices = @transform_7, window_bounds = array<i64: 1, 128>}]} {
    %c0 = arith.constant 0 : index
    %c0_0 = arith.constant 0 : index
    %0 = vector.load %arg2[%c0, %c0_0] : memref<64x32xbf16, #tpu.memory_space<vmem>>, vector<64x32xbf16>
    %c0_1 = arith.constant 0 : index
    %c0_2 = arith.constant 0 : index
    %1 = vector.load %arg1[%c0_1, %c0_2] : memref<32x128xbf16, #tpu.memory_space<vmem>>, vector<32x128xbf16>
    %cst = arith.constant dense<0.000000e+00> : vector<64x128xf32>
    %2 = tpu.matmul %0, %1, %cst {dimension_numbers = #tpu.dot_dimension_numbers<[1], [0], [0], [1], [0, 0, 1, 1], [], []>} : vector<64x32xbf16>, vector<32x128xbf16>, vector<64x128xf32> -> vector<64x128xf32>
    %c0_3 = arith.constant 0 : index
    %c0_4 = arith.constant 0 : index
    %3 = vector.load %arg3[%c0_3, %c0_4] : memref<64x1xf32, #tpu.memory_space<vmem>>, vector<64x1xf32>
    %4 = vector.broadcast %3 : vector<64x1xf32> to vector<64x128xf32>
    %5 = arith.addf %2, %4 : vector<64x128xf32>
    %6 = math.tanh %5 : vector<64x128xf32>
    %c0_5 = arith.constant 0 : index
    %c0_6 = arith.constant 0 : index
    %7 = vector.load %arg4[%c0_5, %c0_6] : memref<64x64xbf16, #tpu.memory_space<vmem>>, vector<64x64xbf16>
    %8 = arith.truncf %6 : vector<64x128xf32> to vector<64x128xbf16>
    %cst_7 = arith.constant dense<0.000000e+00> : vector<64x128xf32>
    %9 = tpu.matmul %7, %8, %cst_7 {dimension_numbers = #tpu.dot_dimension_numbers<[1], [0], [0], [1], [0, 0, 1, 1], [], []>} : vector<64x64xbf16>, vector<64x128xbf16>, vector<64x128xf32> -> vector<64x128xf32>
    %c0_8 = arith.constant 0 : index
    %c0_9 = arith.constant 0 : index
    %10 = vector.load %arg5[%c0_8, %c0_9] : memref<64x1xf32, #tpu.memory_space<vmem>>, vector<64x1xf32>
    %11 = vector.broadcast %10 : vector<64x1xf32> to vector<64x128xf32>
    %12 = arith.addf %9, %11 : vector<64x128xf32>
    %13 = math.tanh %12 : vector<64x128xf32>
    %c0_10 = arith.constant 0 : index
    %c0_11 = arith.constant 0 : index
    %14 = vector.load %arg6[%c0_10, %c0_11] : memref<64x1xf32, #tpu.memory_space<vmem>>, vector<64x1xf32>
    %15 = vector.broadcast %14 : vector<64x1xf32> to vector<64x128xf32>
    %16 = arith.mulf %13, %15 : vector<64x128xf32>
    %cst_12 = arith.constant dense<0.000000e+00> : vector<128xf32>
    %17 = vector.multi_reduction <add>, %16, %cst_12 [0] : vector<64x128xf32> to vector<128xf32>
    %18 = vector.shape_cast %17 : vector<128xf32> to vector<1x128xf32>
    %c0_13 = arith.constant 0 : index
    %c0_14 = arith.constant 0 : index
    %19 = vector.load %arg7[%c0_13, %c0_14] : memref<1x1xf32, #tpu.memory_space<vmem>>, vector<1x1xf32>
    %20 = vector.broadcast %19 : vector<1x1xf32> to vector<1x128xf32>
    %21 = arith.addf %18, %20 : vector<1x128xf32>
    %c0_15 = arith.constant 0 : index
    %c0_16 = arith.constant 0 : index
    %22 = vector.load %arg8[%c0_15, %c0_16] : memref<1x128xf32, #tpu.memory_space<vmem>>, vector<1x128xf32>
    tpu.vector_store %arg8[%c0_15, %c0_16], %21 {strides = array<i32>} : memref<1x128xf32, #tpu.memory_space<vmem>>, vector<1x128xf32>,
    return
  }
  func.func @transform_0(%arg0: i32) -> (i32, i32) {
    %c0_i32 = arith.constant 0 : i32
    %c0_i32_0 = arith.constant 0 : i32
    return %c0_i32, %arg0 : i32, i32
  }
  func.func @transform_1(%arg0: i32) -> (i32, i32) {
    %c0_i32 = arith.constant 0 : i32
    %c0_i32_0 = arith.constant 0 : i32
    %c0_i32_1 = arith.constant 0 : i32
    return %c0_i32, %c0_i32_0 : i32, i32
  }
  func.func @transform_2(%arg0: i32) -> (i32, i32) {
    %c0_i32 = arith.constant 0 : i32
    %c0_i32_0 = arith.constant 0 : i32
    %c0_i32_1 = arith.constant 0 : i32
    return %c0_i32, %c0_i32_0 : i32, i32
  }
  func.func @transform_3(%arg0: i32) -> (i32, i32) {
    %c0_i32 = arith.constant 0 : i32
    %c0_i32_0 = arith.constant 0 : i32
    %c0_i32_1 = arith.constant 0 : i32
    return %c0_i32, %c0_i32_0 : i32, i32
  }
  func.func @transform_4(%arg0: i32) -> (i32, i32) {
    %c0_i32 = arith.constant 0 : i32
    %c0_i32_0 = arith.constant 0 : i32
    %c0_i32_1 = arith.constant 0 : i32
    return %c0_i32, %c0_i32_0 : i32, i32
  }
  func.func @transform_5(%arg0: i32) -> (i32, i32) {
    %c0_i32 = arith.constant 0 : i32
    %c0_i32_0 = arith.constant 0 : i32
    %c0_i32_1 = arith.constant 0 : i32
    return %c0_i32, %c0_i32_0 : i32, i32
  }
  func.func @transform_6(%arg0: i32) -> (i32, i32) {
    %c0_i32 = arith.constant 0 : i32
    %c0_i32_0 = arith.constant 0 : i32
    %c0_i32_1 = arith.constant 0 : i32
    return %c0_i32, %c0_i32_0 : i32, i32
  }
  func.func @transform_7(%arg0: i32) -> (i32, i32) {
    %c0_i32 = arith.constant 0 : i32
    %c0_i32_0 = arith.constant 0 : i32
    return %c0_i32, %arg0 : i32, i32
  }
}

</mosaic_0001>

<llo_original>
// kernel: value_forward.1
$region0: #{value_forward.1}
  #allocation0 [shape = 'u32[]', space=smem, size = 0x4, offset = 0x4, fixed_abs, tag = 'smem constant byte address 0x4 - core index']
  #allocation1 [shape = 'u32[144,128]{1,0:T(1,128)}', space=vmem, size = 0x12000, scoped, tag = 'internal scratch']
  #allocation2 [shape = 'f32[1,1]{1,0:T(1,128)S(1)}', space=vmem, size = 0x200, scoped, tag = 'scoped memory for value_forward.1']
  %s0 = inlined_call_operand.vmem [shape: bf16[32,128], index: 0, kind: input, shape index: {}]
  %s1 = inlined_call_operand.vmem [shape: bf16[64,32], index: 1, kind: input, shape index: {}]
  %s2 = inlined_call_operand.vmem [shape: f32[64,1], index: 2, kind: input, shape index: {}]
  %s3 = inlined_call_operand.vmem [shape: bf16[64,64], index: 3, kind: input, shape index: {}]
  %s4 = inlined_call_operand.vmem [shape: f32[64,1], index: 4, kind: input, shape index: {}]
  %s5 = inlined_call_operand.vmem [shape: f32[64,1], index: 5, kind: input, shape index: {}]
  %s6 = inlined_call_operand.<no memory space> [shape: f32[1,1], index: 6, kind: input, shape index: {}]
  %s7 = inlined_call_operand.vmem [shape: f32[1,128], index: 7, kind: output, shape index: {}]
  %s8 = sld [smem:[#allocation0]]
  $region38: #{value_forward.1} parent=0
    _
  %s10 = ssub.s32 1, %s8
  %s11 = scalar_select 0, %s10, %s8
  %v12 = vstv %s6
  %13 = vst [vmem:[#allocation2] sm:$0x1] %v12
  // Predicated region
  $region2: #{value_forward.1} parent=0 // pred_check
    _
  $region3: #{value_forward.1} parent=0 // pred_check_branch
    %15 = sbr.rel (0) target = $region5
  $region4: #{value_forward.1} parent=0 // pred_region
    _
  $region5: #{value_forward.1} parent=0 // pred_fallthru
    _
  // Predicated region
  $region6: #{value_forward.1} parent=0 // pred_check
    _
  $region7: #{value_forward.1} parent=0 // pred_check_branch
    %17 = sbr.rel (0) target = $region9
  $region8: #{value_forward.1} parent=0 // pred_region
    _
  $region9: #{value_forward.1} parent=0 // pred_fallthru
    _
  // Predicated region
  $region10: #{value_forward.1} parent=0 // pred_check
    _
  $region11: #{value_forward.1} parent=0 // pred_check_branch
    %19 = sbr.rel (0) target = $region13
  $region12: #{value_forward.1} parent=0 // pred_region
    _
  $region13: #{value_forward.1} parent=0 // pred_fallthru
    _
  // Predicated region
  $region14: #{value_forward.1} parent=0 // pred_check
    _
  $region15: #{value_forward.1} parent=0 // pred_check_branch
    %21 = sbr.rel (0) target = $region17
  $region16: #{value_forward.1} parent=0 // pred_region
    _
  $region17: #{value_forward.1} parent=0 // pred_fallthru
    _
  // Predicated region
  $region18: #{value_forward.1} parent=0 // pred_check
    _
  $region19: #{value_forward.1} parent=0 // pred_check_branch
    %23 = sbr.rel (0) target = $region21
  $region20: #{value_forward.1} parent=0 // pred_region
    _
  $region21: #{value_forward.1} parent=0 // pred_fallthru
    _
  // Predicated region
  $region22: #{value_forward.1} parent=0 // pred_check
    _
  $region23: #{value_forward.1} parent=0 // pred_check_branch
    %25 = sbr.rel (0) target = $region25
  $region24: #{value_forward.1} parent=0 // pred_region
    _
  $region25: #{value_forward.1} parent=0 // pred_fallthru
    _
  // Predicated region
  $region26: #{value_forward.1} parent=0 // pred_check
    _
  $region27: #{value_forward.1} parent=0 // pred_check_branch
    %27 = sbr.rel (0) target = $region29
  $region28: #{value_forward.1} parent=0 // pred_region
    _
  $region29: #{value_forward.1} parent=0 // pred_fallthru
    _
  %v29 = vld [vmem:[%s1] sm:$0xf]
  %v30 = vld [vmem:[%s1 + $0x4] sm:$0xf]
  %v31 = vld [vmem:[%s1 + $0x8] sm:$0xf]
  %v32 = vld [vmem:[%s1 + $0xc] sm:$0xf]
  %v33 = vld [vmem:[%s1 + $0x10] sm:$0xf]
  %v34 = vld [vmem:[%s1 + $0x14] sm:$0xf]
  %v35 = vld [vmem:[%s1 + $0x18] sm:$0xf]
  %v36 = vld [vmem:[%s1 + $0x1c] sm:$0xf]
  %v37 = vld [vmem:[%s0] sm:$0xf]
  %v38 = vld [vmem:[%s0 + $0x4] sm:$0xf]
  %v39 = vld [vmem:[%s0 + $0x8] sm:$0xf]
  %v40 = vld [vmem:[%s0 + $0xc] sm:$0xf]
  %v41 = vld [vmem:[%s2] sm:$0xff]
  %v42 = vld [vmem:[%s2 + $0x8] sm:$0xff]
  %v43 = vld [vmem:[%s2 + $0x10] sm:$0xff]
  %v44 = vld [vmem:[%s2 + $0x18] sm:$0xff]
  %v45 = vld [vmem:[%s2 + $0x20] sm:$0xff]
  %v46 = vld [vmem:[%s2 + $0x28] sm:$0xff]
  %v47 = vld [vmem:[%s2 + $0x30] sm:$0xff]
  %v48 = vld [vmem:[%s2 + $0x38] sm:$0xff]
  %50 = vset.pattern.permute.xlu0 0
  %51 = vperm.xlu0 %50, %v41
  %v52 = vpop.permute.xlu0 %51
  %55 = vset.pattern.permute.xlu0 0
  %56 = vperm.xlu0 %55, %v42
  %v57 = vpop.permute.xlu0 %56
  %60 = vset.pattern.permute.xlu0 0
  %61 = vperm.xlu0 %60, %v43
  %v62 = vpop.permute.xlu0 %61
  %65 = vset.pattern.permute.xlu0 0
  %66 = vperm.xlu0 %65, %v44
  %v67 = vpop.permute.xlu0 %66
  %70 = vset.pattern.permute.xlu0 0
  %71 = vperm.xlu0 %70, %v45
  %v72 = vpop.permute.xlu0 %71
  %75 = vset.pattern.permute.xlu0 0
  %76 = vperm.xlu0 %75, %v46
  %v77 = vpop.permute.xlu0 %76
  %80 = vset.pattern.permute.xlu0 0
  %81 = vperm.xlu0 %80, %v47
  %v82 = vpop.permute.xlu0 %81
  %85 = vset.pattern.permute.xlu0 0
  %86 = vperm.xlu0 %85, %v48
  %v87 = vpop.permute.xlu0 %86
  %v97 = vunpack.c.l.b16 %v29
  %v98 = vunpack.c.l.b16 %v30
  %v99 = vunpack.c.l.b16 %v31
  %v100 = vunpack.c.l.b16 %v32
  %v101 = vunpack.c.l.b16 %v33
  %v102 = vunpack.c.l.b16 %v34
  %v103 = vunpack.c.l.b16 %v35
  %v104 = vunpack.c.l.b16 %v36
  %v105 = vpack.c.b16 %v98, %v97
  %v106 = vpack.c.b16 %v100, %v99
  %v107 = vpack.c.b16 %v102, %v101
  %v108 = vpack.c.b16 %v104, %v103
  %v113 = vunpack.c.l.b16 %v37
  %v114 = vunpack.c.l.b16 %v38
  %v115 = vunpack.c.l.b16 %v39
  %v116 = vunpack.c.l.b16 %v40
  %v117 = vpack.c.b16 %v114, %v113
  %v118 = vpack.c.b16 %v116, %v115
  %vm121 = vcmask 261120
  %v123 = vsel %vm121, %v105, 0
  %v126 = vsel %vm121, %v106, 0
  %v129 = vsel %vm121, %v107, 0
  %v132 = vsel %vm121, %v108, 0
  %134 = vmatprep.subr.bf16.mxu0 0
  %135 = vmatpush1.bf16.msra.mxu0 %v117
  %136 = vmatprep.subr.bf16.mxu0 0
  %137 = vmatpush1.bf16.msra.mxu0 %v118
  %138 = vmatprep.subr.bf16.mxu0 0
  %139 = vmatpush1.bf16.msra.mxu0 0
  %140 = vmatprep.subr.bf16.mxu0 0
  %141 = vmatpush1.bf16.msra.mxu0 0
  %142 = vmatprep.subr.bf16.mxu0 0
  %143 = vmatpush1.bf16.msra.mxu0 0
  %144 = vmatprep.subr.bf16.mxu0 0
  %145 = vmatpush1.bf16.msra.mxu0 0
  %146 = vmatprep.subr.bf16.mxu0 0
  %147 = vmatpush1.bf16.msra.mxu0 0
  %148 = vmatprep.subr.bf16.mxu0 0
  %149 = vmatpush1.bf16.msra.mxu0 0
  %150 = vmatprep.subr.bf16.mxu0 0
  %151 = vmatpush1.bf16.msra.mxu0 0
  %152 = vmatprep.subr.bf16.mxu0 0
  %153 = vmatpush1.bf16.msra.mxu0 0
  %154 = vmatprep.subr.bf16.mxu0 0
  %155 = vmatpush1.bf16.msra.mxu0 0
  %156 = vmatprep.subr.bf16.mxu0 0
  %157 = vmatpush1.bf16.msra.mxu0 0
  %158 = vmatprep.subr.bf16.mxu0 0
  %159 = vmatpush1.bf16.msra.mxu0 0
  %160 = vmatprep.subr.bf16.mxu0 0
  %161 = vmatpush1.bf16.msra.mxu0 0
  %162 = vmatprep.subr.bf16.mxu0 0
  %163 = vmatpush1.bf16.msra.mxu0 0
  %164 = vmatprep.subr.bf16.mxu0 0
  %165 = vmatpush1.bf16.msra.mxu0 0
  %166 = vmatprep.mubr.bf16.mxu0 0
  %167 = vmatmul.mubr.bf16.gmra.mrb[0].mxu0 %v123
  %v168 = vpop.f32.mrb[0].mxu0
  %v169 = vadd.f32 %v52, %v168
  %v170 = vpop.f32.mrb[0].mxu0
  %v171 = vpop.f32.mrb[0].mxu0
  %v172 = vadd.f32 %v57, %v171
  %v173 = vpop.f32.mrb[0].mxu0
  %174 = vmatprep.mubr.bf16.mxu0 0
  %175 = vmatmul.mubr.bf16.gmra.mrb[0].mxu0 %v126
  %v176 = vpop.f32.mrb[0].mxu0
  %v177 = vadd.f32 %v62, %v176
  %v178 = vpop.f32.mrb[0].mxu0
  %v179 = vpop.f32.mrb[0].mxu0
  %v180 = vadd.f32 %v67, %v179
  %v181 = vpop.f32.mrb[0].mxu0
  %182 = vmatprep.mubr.bf16.mxu0 0
  %183 = vmatmul.mubr.bf16.gmra.mrb[0].mxu0 %v129
  %v184 = vpop.f32.mrb[0].mxu0
  %v185 = vadd.f32 %v72, %v184
  %v186 = vpop.f32.mrb[0].mxu0
  %v187 = vpop.f32.mrb[0].mxu0
  %v188 = vadd.f32 %v77, %v187
  %v189 = vpop.f32.mrb[0].mxu0
  %190 = vmatprep.mubr.bf16.mxu0 0
  %191 = vmatmul.mubr.bf16.gmra.mrb[0].mxu0 %v132
  %v192 = vpop.f32.mrb[0].mxu0
  %v193 = vadd.f32 %v82, %v192
  %v194 = vpop.f32.mrb[0].mxu0
  %v195 = vpop.f32.mrb[0].mxu0
  %v196 = vadd.f32 %v87, %v195
  %v197 = vpop.f32.mrb[0].mxu0
  %198 = vdwg.mxu0
  %v199 = vtanh.pop %v169
  %v200 = vtanh.pop %v172
  %v201 = vtanh.pop %v177
  %v202 = vtanh.pop %v180
  %v203 = vtanh.pop %v185
  %v204 = vtanh.pop %v188
  %v205 = vtanh.pop %v193
  %v206 = vtanh.pop %v196
  %v207 = vld [vmem:[%s3] sm:$0xf]
  %v208 = vld [vmem:[%s3 + $0x4] sm:$0xf]
  %v209 = vld [vmem:[%s3 + $0x8] sm:$0xf]
  %v210 = vld [vmem:[%s3 + $0xc] sm:$0xf]
  %v211 = vld [vmem:[%s3 + $0x10] sm:$0xf]
  %v212 = vld [vmem:[%s3 + $0x14] sm:$0xf]
  %v213 = vld [vmem:[%s3 + $0x18] sm:$0xf]
  %v214 = vld [vmem:[%s3 + $0x1c] sm:$0xf]
  %v215 = vpack.c.bf16 %v200, %v199
  %v216 = vpack.c.bf16 %v202, %v201
  %v217 = vpack.c.bf16 %v204, %v203
  %v218 = vpack.c.bf16 %v206, %v205
  %v219 = vld [vmem:[%s4] sm:$0xff]
  %v220 = vld [vmem:[%s4 + $0x8] sm:$0xff]
  %v221 = vld [vmem:[%s4 + $0x10] sm:$0xff]
  %v222 = vld [vmem:[%s4 + $0x18] sm:$0xff]
  %v223 = vld [vmem:[%s4 + $0x20] sm:$0xff]
  %v224 = vld [vmem:[%s4 + $0x28] sm:$0xff]
  %v225 = vld [vmem:[%s4 + $0x30] sm:$0xff]
  %v226 = vld [vmem:[%s4 + $0x38] sm:$0xff]
  %228 = vset.pattern.permute.xlu0 0
  %229 = vperm.xlu0 %228, %v219
  %v230 = vpop.permute.xlu0 %229
  %233 = vset.pattern.permute.xlu0 0
  %234 = vperm.xlu0 %233, %v220
  %v235 = vpop.permute.xlu0 %234
  %238 = vset.pattern.permute.xlu0 0
  %239 = vperm.xlu0 %238, %v221
  %v240 = vpop.permute.xlu0 %239
  %243 = vset.pattern.permute.xlu0 0
  %244 = vperm.xlu0 %243, %v222
  %v245 = vpop.permute.xlu0 %244
  %248 = vset.pattern.permute.xlu0 0
  %249 = vperm.xlu0 %248, %v223
  %v250 = vpop.permute.xlu0 %249
  %253 = vset.pattern.permute.xlu0 0
  %254 = vperm.xlu0 %253, %v224
  %v255 = vpop.permute.xlu0 %254
  %258 = vset.pattern.permute.xlu0 0
  %259 = vperm.xlu0 %258, %v225
  %v260 = vpop.permute.xlu0 %259
  %263 = vset.pattern.permute.xlu0 0
  %264 = vperm.xlu0 %263, %v226
  %v265 = vpop.permute.xlu0 %264
  %v275 = vunpack.c.l.b16 %v207
  %v276 = vunpack.c.l.b16 %v208
  %v277 = vunpack.c.l.b16 %v209
  %v278 = vunpack.c.l.b16 %v210
  %v279 = vunpack.c.l.b16 %v211
  %v280 = vunpack.c.l.b16 %v212
  %v281 = vunpack.c.l.b16 %v213
  %v282 = vunpack.c.l.b16 %v214
  %v283 = vpack.c.b16 %v276, %v275
  %v284 = vpack.c.b16 %v278, %v277
  %v285 = vpack.c.b16 %v280, %v279
  %v286 = vpack.c.b16 %v282, %v281
  %vm287 = vcmask 523264
  %v289 = vsel %vm287, %v283, 0
  %v292 = vsel %vm287, %v284, 0
  %v295 = vsel %vm287, %v285, 0
  %v298 = vsel %vm287, %v286, 0
  %300 = vmatprep.subr.bf16.mxu0 0
  %301 = vmatpush1.bf16.msra.mxu0 %v215
  %302 = vmatprep.subr.bf16.mxu0 0
  %303 = vmatpush1.bf16.msra.mxu0 %v216
  %304 = vmatprep.subr.bf16.mxu0 0
  %305 = vmatpush1.bf16.msra.mxu0 %v217
  %306 = vmatprep.subr.bf16.mxu0 0
  %307 = vmatpush1.bf16.msra.mxu0 %v218
  %308 = vmatprep.subr.bf16.mxu0 0
  %309 = vmatpush1.bf16.msra.mxu0 0
  %310 = vmatprep.subr.bf16.mxu0 0
  %311 = vmatpush1.bf16.msra.mxu0 0
  %312 = vmatprep.subr.bf16.mxu0 0
  %313 = vmatpush1.bf16.msra.mxu0 0
  %314 = vmatprep.subr.bf16.mxu0 0
  %315 = vmatpush1.bf16.msra.mxu0 0
  %316 = vmatprep.subr.bf16.mxu0 0
  %317 = vmatpush1.bf16.msra.mxu0 0
  %318 = vmatprep.subr.bf16.mxu0 0
  %319 = vmatpush1.bf16.msra.mxu0 0
  %320 = vmatprep.subr.bf16.mxu0 0
  %321 = vmatpush1.bf16.msra.mxu0 0
  %322 = vmatprep.subr.bf16.mxu0 0
  %323 = vmatpush1.bf16.msra.mxu0 0
  %324 = vmatprep.subr.bf16.mxu0 0
  %325 = vmatpush1.bf16.msra.mxu0 0
  %326 = vmatprep.subr.bf16.mxu0 0
  %327 = vmatpush1.bf16.msra.mxu0 0
  %328 = vmatprep.subr.bf16.mxu0 0
  %329 = vmatpush1.bf16.msra.mxu0 0
  %330 = vmatprep.subr.bf16.mxu0 0
  %331 = vmatpush1.bf16.msra.mxu0 0
  %332 = vmatprep.mubr.bf16.mxu0 0
  %333 = vmatmul.mubr.bf16.gmra.mrb[0].mxu0 %v289
  %v334 = vpop.f32.mrb[0].mxu0
  %v335 = vadd.f32 %v230, %v334
  %v336 = vpop.f32.mrb[0].mxu0
  %v337 = vpop.f32.mrb[0].mxu0
  %v338 = vadd.f32 %v235, %v337
  %v339 = vpop.f32.mrb[0].mxu0
  %340 = vmatprep.mubr.bf16.mxu0 0
  %341 = vmatmul.mubr.bf16.gmra.mrb[0].mxu0 %v292
  %v342 = vpop.f32.mrb[0].mxu0
  %v343 = vadd.f32 %v240, %v342
  %v344 = vpop.f32.mrb[0].mxu0
  %v345 = vpop.f32.mrb[0].mxu0
  %v346 = vadd.f32 %v245, %v345
  %v347 = vpop.f32.mrb[0].mxu0
  %348 = vmatprep.mubr.bf16.mxu0 0
  %349 = vmatmul.mubr.bf16.gmra.mrb[0].mxu0 %v295
  %v350 = vpop.f32.mrb[0].mxu0
  %v351 = vadd.f32 %v250, %v350
  %v352 = vpop.f32.mrb[0].mxu0
  %v353 = vpop.f32.mrb[0].mxu0
  %v354 = vadd.f32 %v255, %v353
  %v355 = vpop.f32.mrb[0].mxu0
  %356 = vmatprep.mubr.bf16.mxu0 0
  %357 = vmatmul.mubr.bf16.gmra.mrb[0].mxu0 %v298
  %v358 = vpop.f32.mrb[0].mxu0
  %v359 = vadd.f32 %v260, %v358
  %v360 = vpop.f32.mrb[0].mxu0
  %v361 = vpop.f32.mrb[0].mxu0
  %v362 = vadd.f32 %v265, %v361
  %v363 = vpop.f32.mrb[0].mxu0
  %364 = vdwg.mxu0
  %v365 = vtanh.pop %v335
  %v366 = vtanh.pop %v338
  %v367 = vtanh.pop %v343
  %v368 = vtanh.pop %v346
  %v369 = vtanh.pop %v351
  %v370 = vtanh.pop %v354
  %v371 = vtanh.pop %v359
  %v372 = vtanh.pop %v362
  %v373 = vld [vmem:[%s5] sm:$0xff]
  %v374 = vld [vmem:[%s5 + $0x8] sm:$0xff]
  %v375 = vld [vmem:[%s5 + $0x10] sm:$0xff]
  %v376 = vld [vmem:[%s5 + $0x18] sm:$0xff]
  %v377 = vld [vmem:[%s5 + $0x20] sm:$0xff]
  %v378 = vld [vmem:[%s5 + $0x28] sm:$0xff]
  %v379 = vld [vmem:[%s5 + $0x30] sm:$0xff]
  %v380 = vld [vmem:[%s5 + $0x38] sm:$0xff]
  %382 = vset.pattern.permute.xlu0 0
  %383 = vperm.xlu0 %382, %v373
  %v384 = vpop.permute.xlu0 %383
  %387 = vset.pattern.permute.xlu0 0
  %388 = vperm.xlu0 %387, %v374
  %v389 = vpop.permute.xlu0 %388
  %392 = vset.pattern.permute.xlu0 0
  %393 = vperm.xlu0 %392, %v375
  %v394 = vpop.permute.xlu0 %393
  %397 = vset.pattern.permute.xlu0 0
  %398 = vperm.xlu0 %397, %v376
  %v399 = vpop.permute.xlu0 %398
  %402 = vset.pattern.permute.xlu0 0
  %403 = vperm.xlu0 %402, %v377
  %v404 = vpop.permute.xlu0 %403
  %407 = vset.pattern.permute.xlu0 0
  %408 = vperm.xlu0 %407, %v378
  %v409 = vpop.permute.xlu0 %408
  %412 = vset.pattern.permute.xlu0 0
  %413 = vperm.xlu0 %412, %v379
  %v414 = vpop.permute.xlu0 %413
  %417 = vset.pattern.permute.xlu0 0
  %418 = vperm.xlu0 %417, %v380
  %v419 = vpop.permute.xlu0 %418
  %v421 = vmul.f32 %v365, %v384
  %v422 = vmul.f32 %v366, %v389
  %v423 = vmul.f32 %v367, %v394
  %v424 = vmul.f32 %v368, %v399
  %v425 = vmul.f32 %v369, %v404
  %v426 = vmul.f32 %v370, %v409
  %v427 = vmul.f32 %v371, %v414
  %v428 = vmul.f32 %v372, %v419
  %v429 = vadd.f32 %v421, %v422
  %v430 = vadd.f32 %v429, %v423
  %v431 = vadd.f32 %v430, %v424
  %v432 = vadd.f32 %v431, %v425
  %v433 = vadd.f32 %v432, %v426
  %v434 = vadd.f32 %v433, %v427
  %v435 = vadd.f32 %v434, %v428
  %v436 = vrot.slane %v435, 4
  %v437 = vadd.f32 %v435, %v436
  %v438 = vrot.slane %v437, 2
  %v439 = vadd.f32 %v437, %v438
  %v440 = vrot.slane %v439, 1
  %v441 = vadd.f32 %v439, %v440
  %v442 = vld [vmem:[#allocation2] sm:$0x1]
  %444 = vset.pattern.permute.xlu0 0
  %445 = vperm.xlu0 %444, %v442
  %v446 = vpop.permute.xlu0 %445
  %v448 = vlaneseq
  %v449 = vshrl.u32 %v448, 7
  %v450 = vsub.s32 0, %v449
  %v451 = vrot.slane %v446, %v450
  %v452 = vadd.f32 %v441, %v451
  %453 = vst [vmem:[%s7] sm:$0x1] %v452
  // Predicated region
  $region30: #{value_forward.1} parent=0 // pred_check
    _
  $region31: #{value_forward.1} parent=0 // pred_check_branch
    %455 = sbr.rel (0) target = $region33
  $region32: #{value_forward.1} parent=0 // pred_region
    _
  $region33: #{value_forward.1} parent=0 // pred_fallthru
    _
  // Predicated region
  $region34: #{value_forward.1} parent=0 // pred_check
    _
  $region35: #{value_forward.1} parent=0 // pred_check_branch
    %457 = sbr.rel (0) target = $region37
  $region36: #{value_forward.1} parent=0 // pred_region
    _
  $region37: #{value_forward.1} parent=0 // pred_fallthru
    _

</llo_original>
